<compile_context>
chip_gen: v6e
topology: v6e:2x2x1
jax: 0.10.0
libtpu: 0.0.40
codegen_flags: <defaults>
</compile_context>

<pallas_src>
from functools import partial

import jax
import jax.numpy as jnp
from jax.experimental import pallas as pl
from jax.experimental.pallas import tpu as pltpu


def _round_up(x, m):
    return ((x + m - 1) // m) * m


def _masked_concept_loss_kernel(scores_ref, gold_ref, mask_ref, out_ref, *,
                                weight, multilabel, batch, block_b, approx):
    s = scores_ref[...].astype(jnp.float32)          # (TB, C)
    g = gold_ref[...].astype(jnp.float32)            # (TB, C)
    m = mask_ref[...] != 0                           # (1, C), broadcasts over TB

    # gold_scores[:, mask] = -1000
    g = jnp.where(m, jnp.float32(-1000.0), g)
    # scores[:, mask] *= weight   (statically skipped when weight == 1)
    if weight != 1.0:
        s = s * jnp.where(m, jnp.float32(weight), jnp.float32(1.0))

    if multilabel:
        p = jax.nn.sigmoid(s)
        q = jax.nn.sigmoid(g)
    else:
        # Numerically-stable softmax along the last (lane) dim.
        s = s - jnp.max(s, axis=-1, keepdims=True)
        g = g - jnp.max(g, axis=-1, keepdims=True)
        es = jnp.exp(s)
        eg = jnp.exp(g)
        p = es * pl.reciprocal(jnp.sum(es, axis=-1, keepdims=True), approx=approx)
        q = eg * pl.reciprocal(jnp.sum(eg, axis=-1, keepdims=True), approx=approx)

    diff = jnp.abs(p - q)                            # (TB, C)

    # Mask out padded rows of the ragged last tile (static check).
    if batch % block_b:
        row = (jax.lax.broadcasted_iota(jnp.int32, diff.shape, 0)
               + pl.program_id(0) * block_b)
        diff = jnp.where(row < batch, diff, jnp.float32(0.0))

    # Per-tile partial sum, splat into a full (8,128) vreg -> unmasked store.
    total = jnp.sum(diff, axis=-1, keepdims=True)    # (TB, 1)
    total = jnp.sum(total, axis=0, keepdims=True)    # (1, 1)
    out_ref[...] = jnp.broadcast_to(total, out_ref.shape)


def masked_concept_loss(scores, gold_scores, mask, *, weight=1.0,
                        multilabel=False, block_b=None, approx_recip=True):
    """Pallas wrapper. scores/gold_scores: (B, C) float; mask: (C,) bool."""
    B, C = scores.shape
    assert gold_scores.shape == (B, C)

    # Pick the batch-tile size: biggest multiple of 8 whose f32 block stays
    # under ~2 MiB (keeps 2 inputs x 2 pipeline buffers + f32 temporaries well
    # inside v7x's VMEM), capped at 1024 rows and at the (padded) batch.
    if block_b is None:
        budget_bytes = 2 * 1024 * 1024
        tb = budget_bytes // (C * 4)
        tb = max(8, min(1024, (tb // 8) * 8))
    else:
        tb = _round_up(int(block_b), 8)
    tb = min(tb, _round_up(B, 8))
    num_tiles = pl.cdiv(B, tb)

    mask2d = mask.astype(jnp.int32).reshape(1, C)

    kernel = partial(_masked_concept_loss_kernel,
                     weight=float(weight), multilabel=bool(multilabel),
                     batch=B, block_b=tb, approx=bool(approx_recip))

    bytes_accessed = (scores.size * scores.dtype.itemsize
                      + gold_scores.size * gold_scores.dtype.itemsize
                      + mask2d.size * 4
                      + num_tiles * 8 * 128 * 4)

    partials = pl.pallas_call(
        kernel,
        out_shape=jax.ShapeDtypeStruct((num_tiles * 8, 128), jnp.float32),
        grid=(num_tiles,),
        in_specs=[
            pl.BlockSpec((tb, C), lambda i: (i, 0)),   # scores tile
            pl.BlockSpec((tb, C), lambda i: (i, 0)),   # gold tile
            pl.BlockSpec((1, C), lambda i: (0, 0)),    # concept mask (resident)
        ],
        out_specs=pl.BlockSpec((8, 128), lambda i: (i, 0)),
        compiler_params=pltpu.CompilerParams(
            dimension_semantics=("parallel",),
            vmem_limit_bytes=48 * 1024 * 1024),
        cost_estimate=pl.CostEstimate(
            flops=8 * B * C,
            transcendentals=2 * B * C,
            bytes_accessed=int(bytes_accessed)),
    )(scores, gold_scores, mask2d)

    # Each (8,128) block holds the same per-tile scalar; pick one per tile,
    # sum across tiles and apply the single global L1-mean scale.
    per_tile = partials[0::8, 0]                      # (num_tiles,)
    return (0.5 / (B * C)) * jnp.sum(per_tile)


def _reference(scores, gold_scores, mask, *, weight=1.0, multilabel=False):
    """Pure-JAX reference mirroring the PyTorch module."""
    s = scores.astype(jnp.float32)
    g = gold_scores.astype(jnp.float32)
    g = jnp.where(mask[None, :], -1000.0, g)
    s = jnp.where(mask[None, :], s * weight, s)
    if multilabel:
        p, q = jax.nn.sigmoid(s), jax.nn.sigmoid(g)
    else:
        p, q = jax.nn.softmax(s, -1), jax.nn.softmax(g, -1)
    return 0.5 * jnp.mean(jnp.abs(p - q))


if __name__ == "__main__":
    key = jax.random.PRNGKey(0)
    k1, k2 = jax.random.split(key)

    B, C = 8, 32   # batch of score rows, C concepts/classes
    scores = jax.random.normal(k1, (B, C), dtype=jnp.float32)
    gold_scores = jax.random.normal(k2, (B, C), dtype=jnp.float32)
    # Deterministic boolean concept mask (mask every 3rd concept).
    mask = (jnp.arange(C) % 3) == 0

    # Default module config: multilabel=False, weight=1.
    loss = masked_concept_loss(scores, gold_scores, mask,
                               weight=1.0, multilabel=False)
    loss = jax.block_until_ready(loss)
    ref = _reference(scores, gold_scores, mask, weight=1.0, multilabel=False)
    # Tolerance accounts for the approximate EUP reciprocal in the softmax.
    assert jnp.allclose(loss, ref, rtol=1e-3, atol=1e-4), (loss, ref)

    # Non-default weight path (exercises the folded (1,C) multiplier).
    loss_w = jax.block_until_ready(
        masked_concept_loss(scores, gold_scores, mask, weight=2.0))
    ref_w = _reference(scores, gold_scores, mask, weight=2.0)
    assert jnp.allclose(loss_w, ref_w, rtol=1e-3, atol=1e-4), (loss_w, ref_w)

    # Multilabel (sigmoid) branch.
    loss_m = jax.block_until_ready(
        masked_concept_loss(scores, gold_scores, mask, multilabel=True))
    ref_m = _reference(scores, gold_scores, mask, multilabel=True)
    assert jnp.allclose(loss_m, ref_m, rtol=1e-3, atol=1e-4), (loss_m, ref_m)

    print("KERNEL_OK")
</pallas_src>

<mosaic_0001>
module attributes {stable_mosaic.version = 11 : i64} {
  func.func @_masked_concept_loss_kernel(%arg0: i32, %arg1: memref<8x32xf32, #tpu.memory_space<vmem>>, %arg2: memref<8x32xf32, #tpu.memory_space<vmem>>, %arg3: memref<1x32xi32, #tpu.memory_space<vmem>>, %arg4: memref<8x128xf32, #tpu.memory_space<vmem>>) attributes {dimension_semantics = [#tpu.dimension_semantics<parallel>], iteration_bounds = array<i64: 1>, scalar_prefetch = 0 : i64, scratch_operands = 0 : i64, tpu.core_type = #tpu.core_type<tc>, window_params = [{transform_indices = @transform_0, window_bounds = array<i64: 8, 32>}, {transform_indices = @transform_1, window_bounds = array<i64: 8, 32>}, {pipeline_mode = #tpu.pipeline_mode<synchronous>, transform_indices = @transform_2, window_bounds = array<i64: 1, 32>}, {transform_indices = @transform_3, window_bounds = array<i64: 8, 128>}]} {
    %c0 = arith.constant 0 : index
    %c0_0 = arith.constant 0 : index
    %0 = vector.load %arg1[%c0, %c0_0] : memref<8x32xf32, #tpu.memory_space<vmem>>, vector<8x32xf32>
    %c0_1 = arith.constant 0 : index
    %c0_2 = arith.constant 0 : index
    %1 = vector.load %arg2[%c0_1, %c0_2] : memref<8x32xf32, #tpu.memory_space<vmem>>, vector<8x32xf32>
    %c0_3 = arith.constant 0 : index
    %c0_4 = arith.constant 0 : index
    %2 = vector.load %arg3[%c0_3, %c0_4] : memref<1x32xi32, #tpu.memory_space<vmem>>, vector<1x32xi32>
    %c0_i32 = arith.constant 0 : i32
    %3 = vector.broadcast %c0_i32 : i32 to vector<1x32xi32>
    %4 = arith.cmpi ne, %2, %3 : vector<1x32xi32>
    %cst = arith.constant -1.000000e+03 : f32
    %5 = vector.shape_cast %4 : vector<1x32xi1> to vector<1x32xi1>
    %6 = vector.broadcast %5 : vector<1x32xi1> to vector<8x32xi1>
    %7 = vector.broadcast %cst : f32 to vector<8x32xf32>
    %8 = arith.select %6, %7, %1 : vector<8x32xi1>, vector<8x32xf32>
    %cst_5 = arith.constant dense<0xFF800000> : vector<8xf32>
    %9 = vector.multi_reduction <maximumf>, %0, %cst_5 [1] : vector<8x32xf32> to vector<8xf32>
    %10 = vector.shape_cast %9 : vector<8xf32> to vector<8x1xf32>
    %11 = vector.broadcast %10 : vector<8x1xf32> to vector<8x32xf32>
    %12 = arith.subf %0, %11 : vector<8x32xf32>
    %cst_6 = arith.constant dense<0xFF800000> : vector<8xf32>
    %13 = vector.multi_reduction <maximumf>, %8, %cst_6 [1] : vector<8x32xf32> to vector<8xf32>
    %14 = vector.shape_cast %13 : vector<8xf32> to vector<8x1xf32>
    %15 = vector.broadcast %14 : vector<8x1xf32> to vector<8x32xf32>
    %16 = arith.subf %8, %15 : vector<8x32xf32>
    %17 = math.exp %12 : vector<8x32xf32>
    %18 = math.exp %16 : vector<8x32xf32>
    %cst_7 = arith.constant dense<0.000000e+00> : vector<8xf32>
    %19 = vector.multi_reduction <add>, %17, %cst_7 [1] : vector<8x32xf32> to vector<8xf32>
    %20 = vector.shape_cast %19 : vector<8xf32> to vector<8x1xf32>
    %21 = tpu.reciprocal %20 {approx = true} : vector<8x1xf32> -> vector<8x1xf32>
    %22 = vector.broadcast %21 : vector<8x1xf32> to vector<8x32xf32>
    %23 = arith.mulf %17, %22 : vector<8x32xf32>
    %cst_8 = arith.constant dense<0.000000e+00> : vector<8xf32>
    %24 = vector.multi_reduction <add>, %18, %cst_8 [1] : vector<8x32xf32> to vector<8xf32>
    %25 = vector.shape_cast %24 : vector<8xf32> to vector<8x1xf32>
    %26 = tpu.reciprocal %25 {approx = true} : vector<8x1xf32> -> vector<8x1xf32>
    %27 = vector.broadcast %26 : vector<8x1xf32> to vector<8x32xf32>
    %28 = arith.mulf %18, %27 : vector<8x32xf32>
    %29 = arith.subf %23, %28 : vector<8x32xf32>
    %30 = math.absf %29 : vector<8x32xf32>
    %cst_9 = arith.constant dense<0.000000e+00> : vector<8xf32>
    %31 = vector.multi_reduction <add>, %30, %cst_9 [1] : vector<8x32xf32> to vector<8xf32>
    %32 = vector.shape_cast %31 : vector<8xf32> to vector<8x1xf32>
    %cst_10 = arith.constant dense<0.000000e+00> : vector<1xf32>
    %33 = vector.multi_reduction <add>, %32, %cst_10 [0] : vector<8x1xf32> to vector<1xf32>
    %34 = vector.shape_cast %33 : vector<1xf32> to vector<1x1xf32>
    %35 = vector.shape_cast %34 : vector<1x1xf32> to vector<1x1xf32>
    %36 = vector.broadcast %35 : vector<1x1xf32> to vector<8x128xf32>
    %c0_11 = arith.constant 0 : index
    %c0_12 = arith.constant 0 : index
    %37 = vector.load %arg4[%c0_11, %c0_12] : memref<8x128xf32, #tpu.memory_space<vmem>>, vector<8x128xf32>
    tpu.vector_store %arg4[%c0_11, %c0_12], %36 {strides = array<i32>} : memref<8x128xf32, #tpu.memory_space<vmem>>, vector<8x128xf32>,
    return
  }
  func.func @transform_0(%arg0: i32) -> (i32, i32) {
    %c0_i32 = arith.constant 0 : i32
    %c0_i32_0 = arith.constant 0 : i32
    return %arg0, %c0_i32 : i32, i32
  }
  func.func @transform_1(%arg0: i32) -> (i32, i32) {
    %c0_i32 = arith.constant 0 : i32
    %c0_i32_0 = arith.constant 0 : i32
    return %arg0, %c0_i32 : i32, i32
  }
  func.func @transform_2(%arg0: i32) -> (i32, i32) {
    %c0_i32 = arith.constant 0 : i32
    %c0_i32_0 = arith.constant 0 : i32
    %c0_i32_1 = arith.constant 0 : i32
    return %c0_i32, %c0_i32_0 : i32, i32
  }
  func.func @transform_3(%arg0: i32) -> (i32, i32) {
    %c0_i32 = arith.constant 0 : i32
    %c0_i32_0 = arith.constant 0 : i32
    return %arg0, %c0_i32 : i32, i32
  }
}

</mosaic_0001>

<llo_original>
// kernel: tpu_custom_call.1
$region0: #{tpu_custom_call.1}
  #allocation0 [shape = 'u32[]', space=smem, size = 0x4, offset = 0x4, fixed_abs, tag = 'smem constant byte address 0x4 - core index']
  #allocation1 [shape = 'u32[144,128]{1,0:T(1,128)}', space=vmem, size = 0x12000, scoped, tag = 'internal scratch']
  %s0 = inlined_call_operand.hbm [shape: f32[8,32], index: 0, kind: input, shape index: {}]
  %s1 = inlined_call_operand.hbm [shape: f32[8,32], index: 1, kind: input, shape index: {}]
  %s2 = inlined_call_operand.vmem [shape: s32[1,32], index: 2, kind: input, shape index: {}]
  %s3 = inlined_call_operand.hbm [shape: f32[8,128], index: 3, kind: output, shape index: {}]
  %s4 = sld [smem:[#allocation0]]
  $region30: #{tpu_custom_call.1} parent=0
    _
  %s6 = ssub.s32 1, %s4
  %s7 = scalar_select 0, %s6, %s4
  $region1: #{tpu_custom_call.1} parent=0
    #allocation2 [shape = 'u8[4096]{0}', space=vmem, size = 0x1000, scoped, tag = 'input window, operand 0, single buffered']
    #allocation3 [shape = 's32[1]{0}', space=sflag, size = 0x4, scoped, tag = 'scoped memory for tpu_custom_call.1']
    #allocation4 [shape = 's32[1]{0}', space=sflag, size = 0x4, scoped, tag = 'scoped memory for tpu_custom_call.1']
    #allocation5 [shape = 'u8[4096]{0}', space=vmem, size = 0x1000, scoped, tag = 'input window, operand 1, single buffered']
    #allocation6 [shape = 's32[1]{0}', space=sflag, size = 0x4, scoped, tag = 'scoped memory for tpu_custom_call.1']
    #allocation7 [shape = 'u8[4096]{0}', space=vmem, size = 0x1000, scoped, tag = 'output window, operand 0, single buffered']
    %8 = vsyncpa [#allocation3], 0
    %9 = vsyncpa [#allocation6], 0
    %10 = vsyncpa [#allocation4], 0
    // Predicated region
    $region2: #{tpu_custom_call.1} parent=1 // pred_check
      _
    $region3: #{tpu_custom_call.1} parent=1 // pred_check_branch
      %12 = sbr.rel (0) target = $region5
    $region4: #{tpu_custom_call.1} parent=1 // pred_region
      %s14 = ssub.s32 128, 128
      %15 = vsyncadd [#allocation3], %s14
      %s17 = sshll.u32 [#allocation2], 4
      %s18 = int_to_ptr.vmem [resolvable:$true] %s17
      %20 = dma.hbm_to_vmem [thread:$0]  %s0, 128, %s18, [#allocation3]
    $region5: #{tpu_custom_call.1} parent=1 // pred_fallthru
      _
    // Predicated region
    $region6: #{tpu_custom_call.1} parent=1 // pred_check
      _
    $region7: #{tpu_custom_call.1} parent=1 // pred_check_branch
      %22 = sbr.rel (0) target = $region9
    $region8: #{tpu_custom_call.1} parent=1 // pred_region
      %s24 = ssub.s32 128, 128
      %25 = vsyncadd [#allocation6], %s24
      %s27 = sshll.u32 [#allocation5], 4
      %s28 = int_to_ptr.vmem [resolvable:$true] %s27
      %30 = dma.hbm_to_vmem [thread:$0]  %s1, 128, %s28, [#allocation6]
    $region9: #{tpu_custom_call.1} parent=1 // pred_fallthru
      _
    // Predicated region
    $region10: #{tpu_custom_call.1} parent=1 // pred_check
      _
    $region11: #{tpu_custom_call.1} parent=1 // pred_check_branch
      %32 = sbr.rel (0) target = $region13
    $region12: #{tpu_custom_call.1} parent=1 // pred_region
      _
    $region13: #{tpu_custom_call.1} parent=1 // pred_fallthru
      _
    // Predicated region
    $region14: #{tpu_custom_call.1} parent=1 // pred_check
      _
    $region15: #{tpu_custom_call.1} parent=1 // pred_check_branch
      %34 = sbr.rel (0) target = $region17
    $region16: #{tpu_custom_call.1} parent=1 // pred_region
      %35 = dma.done [#allocation3], 128
    $region17: #{tpu_custom_call.1} parent=1 // pred_fallthru
      _
    // Predicated region
    $region18: #{tpu_custom_call.1} parent=1 // pred_check
      _
    $region19: #{tpu_custom_call.1} parent=1 // pred_check_branch
      %37 = sbr.rel (0) target = $region21
    $region20: #{tpu_custom_call.1} parent=1 // pred_region
      %38 = dma.done [#allocation6], 128
    $region21: #{tpu_custom_call.1} parent=1 // pred_fallthru
      _
    %v39 = vld [vmem:[#allocation2] sm:$0xff]
    %v40 = vld [vmem:[#allocation5] sm:$0xff]
    %v41 = vld [vmem:[%s2] sm:$0x1]
    %vm42 = vcmp.ne.s32.totalorder %v41, 0
    %v43 = vsel %vm42, 1, 0
    %v44 = vlaneseq
    %v45 = vshrl.u32 %v44, 7
    %v46 = vsub.s32 0, %v45
    %v47 = vrot.slane %v43, %v46
    %vm48 = vcmp.eq.s32.totalorder %v47, 1
    %v49 = vsel %vm48, -1000.0, %v40
    %vm50 = vcmask 261120
    %v51 = vsel %vm50, %v39, -inf
    %52 = vmax.xlane.f32.xlu0 %v51
    %v53 = vpop.xlane.xlu0 %52
    %v54 = vsub.f32 %v39, %v53
    %v55 = vsel %vm50, %v49, -inf
    %56 = vmax.xlane.f32.xlu0 %v55
    %v57 = vpop.xlane.xlu0 %56
    %v58 = vsub.f32 %v49, %v57
    %v59 = vmul.f32 %v54, 1.442695
    %v60 = vpow.pop %v59
    %v61 = vmul.f32 %v58, 1.442695
    %v62 = vpow.pop %v61
    %v63 = vsel %vm50, %v60, 0.0
    %64 = vadd.xlane.f32.xlu0 %v63
    %v65 = vpop.xlane.xlu0 %64
    %v66 = vrcp.pop %v65
    %v67 = vmul.f32 %v60, %v66
    %v68 = vsel %vm50, %v62, 0.0
    %69 = vadd.xlane.f32.xlu0 %v68
    %v70 = vpop.xlane.xlu0 %69
    %v71 = vrcp.pop %v70
    %v72 = vmul.f32 %v62, %v71
    %v73 = vsub.f32 %v67, %v72
    %v74 = vand.u32 2147483647, %v73
    %v75 = vsel %vm50, %v74, 0.0
    %76 = vadd.xlane.f32.xlu0 %v75
    %v77 = vpop.xlane.xlu0 %76
    %v78 = vrot.slane %v77, 4
    %v79 = vadd.f32 %v77, %v78
    %v80 = vrot.slane %v79, 2
    %v81 = vadd.f32 %v79, %v80
    %v82 = vrot.slane %v81, 1
    %v83 = vadd.f32 %v81, %v82
    %84 = vst [vmem:[#allocation7] sm:$0xff] %v83
    // Predicated region
    $region22: #{tpu_custom_call.1} parent=1 // pred_check
      _
    $region23: #{tpu_custom_call.1} parent=1 // pred_check_branch
      %86 = sbr.rel (0) target = $region25
    $region24: #{tpu_custom_call.1} parent=1 // pred_region
      %s88 = ssub.s32 128, 128
      %89 = vsyncadd [#allocation4], %s88
      %s91 = sshll.u32 [#allocation7], 4
      %s92 = int_to_ptr.vmem [resolvable:$true] %s91
      %94 = dma.vmem_to_hbm [thread:$0]  %s92, 128, %s3, [#allocation4]
    $region25: #{tpu_custom_call.1} parent=1 // pred_fallthru
      _
    // Predicated region
    $region26: #{tpu_custom_call.1} parent=1 // pred_check
      _
    $region27: #{tpu_custom_call.1} parent=1 // pred_check_branch
      %96 = sbr.rel (0) target = $region29
    $region28: #{tpu_custom_call.1} parent=1 // pred_region
      %97 = dma.done [#allocation4], 128
    $region29: #{tpu_custom_call.1} parent=1 // pred_fallthru
      _
    %98 = vsyncpa [#allocation3], 1
    %99 = vsyncpa [#allocation6], 1
    %100 = vsyncpa [#allocation4], 1

</llo_original>
